<compile_context>
chip_gen: v5e
topology: v5e:2x2
jax: 0.10.0
libtpu: 0.0.40
codegen_flags: <defaults>
</compile_context>

<pallas_src>
import functools

import jax
import jax.numpy as jnp
import numpy as np
from jax import lax
from jax.experimental import pallas as pl
from jax.experimental.pallas import tpu as pltpu

BN_EPS = 1e-5
LANE = 128


def _decoder_kernel(*refs, add_residual: bool, inv_batch: float):
    if add_residual:
        (x_ref, w1_ref, b1_ref, gamma_ref, beta_ref, w2_ref, b2_ref,
         xres_ref, o_ref, acc_ref) = refs
    else:
        (x_ref, w1_ref, b1_ref, gamma_ref, beta_ref, w2_ref, b2_ref,
         o_ref, acc_ref) = refs
        xres_ref = None

    k = pl.program_id(1)

    @pl.when(k == 0)
    def _():
        acc_ref[...] = jnp.zeros_like(acc_ref)

    # ---- Linear 1 for this hidden tile: bf16 operands on the MXU, f32 accum ----
    h = jnp.dot(x_ref[...], w1_ref[...],
                preferred_element_type=jnp.float32)            # (B, tH) f32
    h = h + b1_ref[...]

    # ---- BatchNorm1d (training-mode biased batch stats), folded to one affine ----
    s = jnp.sum(h, axis=0, keepdims=True)                      # (1, tH)
    sq = jnp.sum(h * h, axis=0, keepdims=True)                 # (1, tH)
    mean = s * inv_batch
    var = sq * inv_batch - mean * mean                         # biased variance
    scale = gamma_ref[...] * lax.rsqrt(var + BN_EPS)
    shift = beta_ref[...] - mean * scale
    h = jnp.maximum(h * scale + shift, 0.0)                    # fused BN affine + ReLU

    # ---- Linear 2 partial sum over the hidden (reduction) axis ----
    acc_ref[...] += jnp.dot(h.astype(jnp.bfloat16), w2_ref[...],
                            preferred_element_type=jnp.float32)

    @pl.when(k == pl.num_programs(1) - 1)
    def _():
        out = acc_ref[...] + b2_ref[...]
        if add_residual:
            out = out + xres_ref[...]                          # f32 residual
        o_ref[...] = out.astype(o_ref.dtype)


def _round_up(n, m):
    return ((n + m - 1) // m) * m


def _pick_tile(padded_dim, max_tile):
    # padded_dim is a multiple of 128; pick the largest 128-multiple <= max_tile
    # that divides it (so the grid has no ragged blocks).
    t = min(padded_dim, max_tile)
    while padded_dim % t:
        t -= LANE
    return t


def _pad_axis(a, axis, target):
    pad = target - a.shape[axis]
    if pad <= 0:
        return a
    widths = [(0, 0)] * a.ndim
    widths[axis] = (0, pad)
    return jnp.pad(a, widths)


def sparse_decoder(x, w1, b1, gamma, beta, w2, b2, *, max_tile=512):
    """x: (B, Din); w1: (Din, H); b1/gamma/beta: (1, H); w2: (H, Dout); b2: (1, Dout)."""
    batch, input_dim = x.shape
    hidden_dim = w1.shape[1]
    output_dim = w2.shape[1]
    add_residual = (input_dim == output_dim)

    din_p = _round_up(input_dim, LANE)
    h_p = _round_up(hidden_dim, LANE)
    dout_p = _round_up(output_dim, LANE)

    tile_h = _pick_tile(h_p, max_tile)
    tile_out = _pick_tile(dout_p, max_tile)
    grid = (dout_p // tile_out, h_p // tile_h)

    # Lane-dense zero padding of the feature axes (numerically exact, see header).
    x_f32 = _pad_axis(x.astype(jnp.float32), 1, din_p)
    x_bf16 = x_f32.astype(jnp.bfloat16)
    w1_p = _pad_axis(_pad_axis(w1, 0, din_p), 1, h_p).astype(jnp.bfloat16)
    b1_p = _pad_axis(b1.astype(jnp.float32), 1, h_p)
    gamma_p = _pad_axis(gamma.astype(jnp.float32), 1, h_p)
    beta_p = _pad_axis(beta.astype(jnp.float32), 1, h_p)
    w2_p = _pad_axis(_pad_axis(w2, 0, h_p), 1, dout_p).astype(jnp.bfloat16)
    b2_p = _pad_axis(b2.astype(jnp.float32), 1, dout_p)

    in_specs = [
        pl.BlockSpec((batch, din_p), lambda j, k: (0, 0)),       # x (bf16, resident)
        pl.BlockSpec((din_p, tile_h), lambda j, k: (0, k)),      # W1 hidden tile
        pl.BlockSpec((1, tile_h), lambda j, k: (0, k)),          # b1
        pl.BlockSpec((1, tile_h), lambda j, k: (0, k)),          # gamma
        pl.BlockSpec((1, tile_h), lambda j, k: (0, k)),          # beta
        pl.BlockSpec((tile_h, tile_out), lambda j, k: (k, j)),   # W2 tile
        pl.BlockSpec((1, tile_out), lambda j, k: (0, j)),        # b2
    ]
    inputs = [x_bf16, w1_p, b1_p, gamma_p, beta_p, w2_p, b2_p]
    if add_residual:
        # Dout-tiled f32 view of x for the residual add (Din == Dout here).
        in_specs.append(pl.BlockSpec((batch, tile_out), lambda j, k: (0, j)))
        inputs.append(x_f32)

    out_spec = pl.BlockSpec((batch, tile_out), lambda j, k: (0, j))

    # Rough VMEM budget (conservative: f32 everywhere, double-buffered blocks).
    dbl = 2
    vmem_bytes = 4 * (
        dbl * (batch * din_p + din_p * tile_h + 3 * tile_h
               + tile_h * tile_out + tile_out
               + (batch * tile_out if add_residual else 0)
               + batch * tile_out)
        + batch * tile_out)
    vmem_limit = int(min(max(int(vmem_bytes * 1.5) + (4 << 20), 32 << 20), 96 << 20))

    flops = 2 * batch * din_p * h_p * grid[0] + 2 * batch * h_p * dout_p
    bytes_accessed = (2 * (x_bf16.size + w1_p.size + w2_p.size)
                      + 4 * (3 * h_p + dout_p + batch * dout_p
                             + (batch * din_p if add_residual else 0)))
    cost = pl.CostEstimate(flops=flops, transcendentals=h_p * grid[0],
                           bytes_accessed=bytes_accessed)

    kernel = functools.partial(_decoder_kernel, add_residual=add_residual,
                               inv_batch=1.0 / batch)

    out_p = pl.pallas_call(
        kernel,
        out_shape=jax.ShapeDtypeStruct((batch, dout_p), jnp.float32),
        grid_spec=pltpu.PrefetchScalarGridSpec(
            num_scalar_prefetch=0,
            grid=grid,
            in_specs=in_specs,
            out_specs=out_spec,
            scratch_shapes=[pltpu.VMEM((batch, tile_out), jnp.float32)],
        ),
        compiler_params=pltpu.CompilerParams(
            dimension_semantics=("parallel", "arbitrary"),
            vmem_limit_bytes=vmem_limit,
        ),
        cost_estimate=cost,
    )(*inputs)

    return out_p[:, :output_dim]


def _reference(x, w1, b1, gamma, beta, w2, b2):
    # Mirrors the kernel's numerics: bf16 MXU operands, f32 accumulation, f32 BN.
    h = jnp.dot(x.astype(jnp.bfloat16), w1.astype(jnp.bfloat16),
                preferred_element_type=jnp.float32) + b1
    mean = jnp.mean(h, axis=0, keepdims=True)
    var = jnp.mean((h - mean) ** 2, axis=0, keepdims=True)        # biased
    h = (h - mean) * lax.rsqrt(var + BN_EPS) * gamma + beta
    h = jnp.maximum(h, 0.0)
    out = jnp.dot(h.astype(jnp.bfloat16), w2.astype(jnp.bfloat16),
                  preferred_element_type=jnp.float32) + b2
    if x.shape[-1] == out.shape[-1]:
        out = out + x
    return out


if __name__ == "__main__":
    # Module defaults: num_layers=2 -> one (Linear, BN, ReLU) block + final Linear,
    # hidden_dim = input_dim. (Tiny demo shapes are padded to 128 lanes internally.)
    batch, input_dim, output_dim = 8, 32, 32
    hidden_dim = input_dim

    key = jax.random.PRNGKey(0)
    k_x, k_w1, k_b1, k_w2, k_b2 = jax.random.split(key, 5)

    x = jax.random.normal(k_x, (batch, input_dim), dtype=jnp.float32)

    # Deterministic synthetic params (mimics PyTorch uniform fan-in scale).
    bound1 = 1.0 / np.sqrt(input_dim)
    w1 = jax.random.uniform(k_w1, (input_dim, hidden_dim), jnp.float32, -bound1, bound1)
    b1 = jax.random.uniform(k_b1, (1, hidden_dim), jnp.float32, -bound1, bound1)
    gamma = jnp.ones((1, hidden_dim), jnp.float32)   # BatchNorm1d default weight
    beta = jnp.zeros((1, hidden_dim), jnp.float32)   # BatchNorm1d default bias
    bound2 = 1.0 / np.sqrt(hidden_dim)
    w2 = jax.random.uniform(k_w2, (hidden_dim, output_dim), jnp.float32, -bound2, bound2)
    b2 = jax.random.uniform(k_b2, (1, output_dim), jnp.float32, -bound2, bound2)

    out = sparse_decoder(x, w1, b1, gamma, beta, w2, b2)
    out = jax.block_until_ready(out)

    ref = _reference(x, w1, b1, gamma, beta, w2, b2)
    # bf16 operands on both sides; tolerance covers minor accumulation-order and
    # BN-folding rounding differences.
    np.testing.assert_allclose(np.asarray(out), np.asarray(ref), rtol=5e-3, atol=5e-3)

    print("KERNEL_OK")
</pallas_src>

<mosaic_0001>
module attributes {stable_mosaic.version = 11 : i64} {
  func.func @_decoder_kernel(%arg0: i32, %arg1: i32, %arg2: memref<8x128xbf16, #tpu.memory_space<vmem>>, %arg3: memref<128x128xbf16, #tpu.memory_space<vmem>>, %arg4: memref<1x128xf32, #tpu.memory_space<vmem>>, %arg5: memref<1x128xf32, #tpu.memory_space<vmem>>, %arg6: memref<1x128xf32, #tpu.memory_space<vmem>>, %arg7: memref<128x128xbf16, #tpu.memory_space<vmem>>, %arg8: memref<1x128xf32, #tpu.memory_space<vmem>>, %arg9: memref<8x128xf32, #tpu.memory_space<vmem>>, %arg10: memref<8x128xf32, #tpu.memory_space<vmem>>, %arg11: memref<8x128xf32, #tpu.memory_space<vmem>>) attributes {dimension_semantics = [#tpu.dimension_semantics<parallel>, #tpu.dimension_semantics<arbitrary>], iteration_bounds = array<i64: 1, 1>, scalar_prefetch = 0 : i64, scratch_operands = 1 : i64, tpu.core_type = #tpu.core_type<tc>, window_params = [{pipeline_mode = #tpu.pipeline_mode<synchronous>, transform_indices = @transform_0, window_bounds = array<i64: 8, 128>}, {transform_indices = @transform_1, window_bounds = array<i64: 128, 128>}, {transform_indices = @transform_2, window_bounds = array<i64: 1, 128>}, {transform_indices = @transform_3, window_bounds = array<i64: 1, 128>}, {transform_indices = @transform_4, window_bounds = array<i64: 1, 128>}, {transform_indices = @transform_5, window_bounds = array<i64: 128, 128>}, {transform_indices = @transform_6, window_bounds = array<i64: 1, 128>}, {transform_indices = @transform_7, window_bounds = array<i64: 8, 128>}, {transform_indices = @transform_8, window_bounds = array<i64: 8, 128>}]} {
    %c0_i32 = arith.constant 0 : i32
    %0 = arith.cmpi eq, %arg1, %c0_i32 : i32
    %1 = arith.extui %0 : i1 to i32
    %c0_i32_0 = arith.constant 0 : i32
    %2 = arith.cmpi ne, %1, %c0_i32_0 : i32
    scf.if %2 {
      %cst_25 = arith.constant 0.000000e+00 : f32
      %43 = vector.broadcast %cst_25 : f32 to vector<8x128xf32>
      %c0_26 = arith.constant 0 : index
      %c0_27 = arith.constant 0 : index
      %44 = vector.load %arg11[%c0_26, %c0_27] : memref<8x128xf32, #tpu.memory_space<vmem>>, vector<8x128xf32>
      tpu.vector_store %arg11[%c0_26, %c0_27], %43 {strides = array<i32>} : memref<8x128xf32, #tpu.memory_space<vmem>>, vector<8x128xf32>,
    } else {
    }
    %c0 = arith.constant 0 : index
    %c0_1 = arith.constant 0 : index
    %3 = vector.load %arg2[%c0, %c0_1] : memref<8x128xbf16, #tpu.memory_space<vmem>>, vector<8x128xbf16>
    %c0_2 = arith.constant 0 : index
    %c0_3 = arith.constant 0 : index
    %4 = vector.load %arg3[%c0_2, %c0_3] : memref<128x128xbf16, #tpu.memory_space<vmem>>, vector<128x128xbf16>
    %cst = arith.constant dense<0.000000e+00> : vector<8x128xf32>
    %5 = tpu.matmul %3, %4, %cst {dimension_numbers = #tpu.dot_dimension_numbers<[1], [0], [0], [1], [0, 0, 1, 1], [], []>} : vector<8x128xbf16>, vector<128x128xbf16>, vector<8x128xf32> -> vector<8x128xf32>
    %c0_4 = arith.constant 0 : index
    %c0_5 = arith.constant 0 : index
    %6 = vector.load %arg4[%c0_4, %c0_5] : memref<1x128xf32, #tpu.memory_space<vmem>>, vector<1x128xf32>
    %7 = vector.broadcast %6 : vector<1x128xf32> to vector<8x128xf32>
    %8 = arith.addf %5, %7 : vector<8x128xf32>
    %cst_6 = arith.constant dense<0.000000e+00> : vector<128xf32>
    %9 = vector.multi_reduction <add>, %8, %cst_6 [0] : vector<8x128xf32> to vector<128xf32>
    %10 = vector.shape_cast %9 : vector<128xf32> to vector<1x128xf32>
    %11 = arith.mulf %8, %8 : vector<8x128xf32>
    %cst_7 = arith.constant dense<0.000000e+00> : vector<128xf32>
    %12 = vector.multi_reduction <add>, %11, %cst_7 [0] : vector<8x128xf32> to vector<128xf32>
    %13 = vector.shape_cast %12 : vector<128xf32> to vector<1x128xf32>
    %cst_8 = arith.constant 1.250000e-01 : f32
    %14 = vector.broadcast %cst_8 : f32 to vector<1x128xf32>
    %15 = arith.mulf %10, %14 : vector<1x128xf32>
    %cst_9 = arith.constant 1.250000e-01 : f32
    %16 = vector.broadcast %cst_9 : f32 to vector<1x128xf32>
    %17 = arith.mulf %13, %16 : vector<1x128xf32>
    %18 = arith.mulf %15, %15 : vector<1x128xf32>
    %19 = arith.subf %17, %18 : vector<1x128xf32>
    %c0_10 = arith.constant 0 : index
    %c0_11 = arith.constant 0 : index
    %20 = vector.load %arg5[%c0_10, %c0_11] : memref<1x128xf32, #tpu.memory_space<vmem>>, vector<1x128xf32>
    %cst_12 = arith.constant 9.99999974E-6 : f32
    %21 = vector.broadcast %cst_12 : f32 to vector<1x128xf32>
    %22 = arith.addf %19, %21 : vector<1x128xf32>
    %23 = math.rsqrt %22 : vector<1x128xf32>
    %24 = arith.mulf %20, %23 : vector<1x128xf32>
    %c0_13 = arith.constant 0 : index
    %c0_14 = arith.constant 0 : index
    %25 = vector.load %arg6[%c0_13, %c0_14] : memref<1x128xf32, #tpu.memory_space<vmem>>, vector<1x128xf32>
    %26 = arith.mulf %15, %24 : vector<1x128xf32>
    %27 = arith.subf %25, %26 : vector<1x128xf32>
    %28 = vector.broadcast %24 : vector<1x128xf32> to vector<8x128xf32>
    %29 = arith.mulf %8, %28 : vector<8x128xf32>
    %30 = vector.broadcast %27 : vector<1x128xf32> to vector<8x128xf32>
    %31 = arith.addf %29, %30 : vector<8x128xf32>
    %cst_15 = arith.constant 0.000000e+00 : f32
    %32 = vector.broadcast %cst_15 : f32 to vector<8x128xf32>
    %33 = arith.maximumf %31, %32 : vector<8x128xf32>
    %c0_16 = arith.constant 0 : index
    %c0_17 = arith.constant 0 : index
    %34 = vector.load %arg11[%c0_16, %c0_17] : memref<8x128xf32, #tpu.memory_space<vmem>>, vector<8x128xf32>
    %35 = arith.truncf %33 : vector<8x128xf32> to vector<8x128xbf16>
    %c0_18 = arith.constant 0 : index
    %c0_19 = arith.constant 0 : index
    %36 = vector.load %arg7[%c0_18, %c0_19] : memref<128x128xbf16, #tpu.memory_space<vmem>>, vector<128x128xbf16>
    %cst_20 = arith.constant dense<0.000000e+00> : vector<8x128xf32>
    %37 = tpu.matmul %35, %36, %cst_20 {dimension_numbers = #tpu.dot_dimension_numbers<[1], [0], [0], [1], [0, 0, 1, 1], [], []>} : vector<8x128xbf16>, vector<128x128xbf16>, vector<8x128xf32> -> vector<8x128xf32>
    %38 = arith.addf %34, %37 : vector<8x128xf32>
    %c0_21 = arith.constant 0 : index
    %c0_22 = arith.constant 0 : index
    %39 = vector.load %arg11[%c0_21, %c0_22] : memref<8x128xf32, #tpu.memory_space<vmem>>, vector<8x128xf32>
    tpu.vector_store %arg11[%c0_21, %c0_22], %38 {strides = array<i32>} : memref<8x128xf32, #tpu.memory_space<vmem>>, vector<8x128xf32>,
    %c0_i32_23 = arith.constant 0 : i32
    %40 = arith.cmpi eq, %arg1, %c0_i32_23 : i32
    %41 = arith.extui %40 : i1 to i32
    %c0_i32_24 = arith.constant 0 : i32
    %42 = arith.cmpi ne, %41, %c0_i32_24 : i32
    scf.if %42 {
      %c0_25 = arith.constant 0 : index
      %c0_26 = arith.constant 0 : index
      %43 = vector.load %arg11[%c0_25, %c0_26] : memref<8x128xf32, #tpu.memory_space<vmem>>, vector<8x128xf32>
      %c0_27 = arith.constant 0 : index
      %c0_28 = arith.constant 0 : index
      %44 = vector.load %arg8[%c0_27, %c0_28] : memref<1x128xf32, #tpu.memory_space<vmem>>, vector<1x128xf32>
      %45 = vector.broadcast %44 : vector<1x128xf32> to vector<8x128xf32>
      %46 = arith.addf %43, %45 : vector<8x128xf32>
      %c0_29 = arith.constant 0 : index
      %c0_30 = arith.constant 0 : index
      %47 = vector.load %arg9[%c0_29, %c0_30] : memref<8x128xf32, #tpu.memory_space<vmem>>, vector<8x128xf32>
      %48 = arith.addf %46, %47 : vector<8x128xf32>
      %c0_31 = arith.constant 0 : index
      %c0_32 = arith.constant 0 : index
      %49 = vector.load %arg10[%c0_31, %c0_32] : memref<8x128xf32, #tpu.memory_space<vmem>>, vector<8x128xf32>
      tpu.vector_store %arg10[%c0_31, %c0_32], %48 {strides = array<i32>} : memref<8x128xf32, #tpu.memory_space<vmem>>, vector<8x128xf32>,
    } else {
    }
    return
  }
  func.func @transform_0(%arg0: i32, %arg1: i32) -> (i32, i32) {
    %c0_i32 = arith.constant 0 : i32
    %c0_i32_0 = arith.constant 0 : i32
    %c0_i32_1 = arith.constant 0 : i32
    return %c0_i32, %c0_i32_0 : i32, i32
  }
  func.func @transform_1(%arg0: i32, %arg1: i32) -> (i32, i32) {
    %c0_i32 = arith.constant 0 : i32
    %c0_i32_0 = arith.constant 0 : i32
    return %c0_i32, %arg1 : i32, i32
  }
  func.func @transform_2(%arg0: i32, %arg1: i32) -> (i32, i32) {
    %c0_i32 = arith.constant 0 : i32
    %c0_i32_0 = arith.constant 0 : i32
    return %c0_i32, %arg1 : i32, i32
  }
  func.func @transform_3(%arg0: i32, %arg1: i32) -> (i32, i32) {
    %c0_i32 = arith.constant 0 : i32
    %c0_i32_0 = arith.constant 0 : i32
    return %c0_i32, %arg1 : i32, i32
  }
  func.func @transform_4(%arg0: i32, %arg1: i32) -> (i32, i32) {
    %c0_i32 = arith.constant 0 : i32
    %c0_i32_0 = arith.constant 0 : i32
    return %c0_i32, %arg1 : i32, i32
  }
  func.func @transform_5(%arg0: i32, %arg1: i32) -> (i32, i32) {
    %c0_i32 = arith.constant 0 : i32
    return %arg1, %arg0 : i32, i32
  }
  func.func @transform_6(%arg0: i32, %arg1: i32) -> (i32, i32) {
    %c0_i32 = arith.constant 0 : i32
    %c0_i32_0 = arith.constant 0 : i32
    return %c0_i32, %arg0 : i32, i32
  }
  func.func @transform_7(%arg0: i32, %arg1: i32) -> (i32, i32) {
    %c0_i32 = arith.constant 0 : i32
    %c0_i32_0 = arith.constant 0 : i32
    return %c0_i32, %arg0 : i32, i32
  }
  func.func @transform_8(%arg0: i32, %arg1: i32) -> (i32, i32) {
    %c0_i32 = arith.constant 0 : i32
    %c0_i32_0 = arith.constant 0 : i32
    return %c0_i32, %arg0 : i32, i32
  }
}

</mosaic_0001>

<llo_original>
// kernel: tpu_custom_call.1
$region0: #{tpu_custom_call.1}
  #allocation0 [shape = 'u32[]', space=smem, size = 0x4, offset = 0x4, fixed_abs, tag = 'smem constant byte address 0x4 - core index']
  #allocation1 [shape = 'u32[72,128]{1,0:T(1,128)}', space=vmem, size = 0x9000, scoped, tag = 'internal scratch']
  #allocation2 [shape = 'f32[8,128]{1,0:T(8,128)}', space=vmem, size = 0x1000, scoped, tag = 'scratch operand']
  %s0 = inlined_call_operand.hbm [shape: bf16[8,128], index: 0, kind: input, shape index: {}]
  %s1 = inlined_call_operand.hbm [shape: bf16[128,128], index: 1, kind: input, shape index: {}]
  %s2 = inlined_call_operand.vmem [shape: f32[1,128], index: 2, kind: input, shape index: {}]
  %s3 = inlined_call_operand.vmem [shape: f32[1,128], index: 3, kind: input, shape index: {}]
  %s4 = inlined_call_operand.vmem [shape: f32[1,128], index: 4, kind: input, shape index: {}]
  %s5 = inlined_call_operand.hbm [shape: bf16[128,128], index: 5, kind: input, shape index: {}]
  %s6 = inlined_call_operand.vmem [shape: f32[1,128], index: 6, kind: input, shape index: {}]
  %s7 = inlined_call_operand.hbm [shape: f32[8,128], index: 7, kind: input, shape index: {}]
  %s8 = inlined_call_operand.hbm [shape: f32[8,128], index: 8, kind: output, shape index: {}]
  %s9 = sld [smem:[#allocation0]]
  $region66: #{tpu_custom_call.1} parent=0
    _
  %s11 = ssub.s32 1, %s9
  %s12 = scalar_select 0, %s11, %s9
  $region1: #{tpu_custom_call.1} parent=0
    #allocation3 [shape = 'u8[2048]{0}', space=vmem, size = 0x800, scoped, tag = 'input window, operand 0, single buffered']
    #allocation4 [shape = 's32[1]{0}', space=sflag, size = 0x4, scoped, tag = 'scoped memory for tpu_custom_call.1']
    #allocation5 [shape = 's32[1]{0}', space=sflag, size = 0x4, scoped, tag = 'scoped memory for tpu_custom_call.1']
    #allocation6 [shape = 'u8[32768]{0}', space=vmem, size = 0x8000, scoped, tag = 'input window, operand 1, single buffered']
    #allocation7 [shape = 's32[1]{0}', space=sflag, size = 0x4, scoped, tag = 'scoped memory for tpu_custom_call.1']
    #allocation8 [shape = 'u8[32768]{0}', space=vmem, size = 0x8000, scoped, tag = 'input window, operand 5, single buffered']
    #allocation9 [shape = 'u8[4096]{0}', space=vmem, size = 0x1000, scoped, tag = 'input window, operand 7, single buffered']
    #allocation10 [shape = 's32[1]{0}', space=sflag, size = 0x4, scoped, tag = 'scoped memory for tpu_custom_call.1']
    #allocation11 [shape = 'u8[4096]{0}', space=vmem, size = 0x1000, scoped, tag = 'output window, operand 0, single buffered']
    %13 = vsyncpa [#allocation4], 0
    %14 = vsyncpa [#allocation7], 0
    %15 = vsyncpa [#allocation10], 0
    %16 = vsyncpa [#allocation5], 0
    // Predicated region
    $region2: #{tpu_custom_call.1} parent=1 // pred_check
      _
    $region3: #{tpu_custom_call.1} parent=1 // pred_check_branch
      %18 = sbr.rel (0) target = $region5
    $region4: #{tpu_custom_call.1} parent=1 // pred_region
      %20 = vsyncadd [#allocation4], 0
      %s22 = sshll.u32 %s0, 4
      %s23 = int_to_ptr.hbm [resolvable:$true] %s22
      %s24 = sshll.u32 [#allocation3], 4
      %s25 = int_to_ptr.vmem [resolvable:$true] %s24
      %27 = dma.hbm_to_vmem [thread:$0]  %s23, 64, %s25, [#allocation4]
    $region5: #{tpu_custom_call.1} parent=1 // pred_fallthru
      _
    // Predicated region
    $region6: #{tpu_custom_call.1} parent=1 // pred_check
      _
    $region7: #{tpu_custom_call.1} parent=1 // pred_check_branch
      %29 = sbr.rel (0) target = $region9
    $region8: #{tpu_custom_call.1} parent=1 // pred_region
      %31 = vsyncadd [#allocation7], 0
      %s32 = sshll.u32 %s1, 4
      %s33 = int_to_ptr.hbm [resolvable:$true] %s32
      %s34 = sshll.u32 [#allocation6], 4
      %s35 = int_to_ptr.vmem [resolvable:$true] %s34
      %40 = dma.hbm_to_vmem [thread:$0]  %s33, 1024, %s35, [#allocation7], 64, 64, 4
    $region9: #{tpu_custom_call.1} parent=1 // pred_fallthru
      _
    // Predicated region
    $region10: #{tpu_custom_call.1} parent=1 // pred_check
      _
    $region11: #{tpu_custom_call.1} parent=1 // pred_check_branch
      %42 = sbr.rel (0) target = $region13
    $region12: #{tpu_custom_call.1} parent=1 // pred_region
      _
    $region13: #{tpu_custom_call.1} parent=1 // pred_fallthru
      _
    // Predicated region
    $region14: #{tpu_custom_call.1} parent=1 // pred_check
      _
    $region15: #{tpu_custom_call.1} parent=1 // pred_check_branch
      %44 = sbr.rel (0) target = $region17
    $region16: #{tpu_custom_call.1} parent=1 // pred_region
      _
    $region17: #{tpu_custom_call.1} parent=1 // pred_fallthru
      _
    // Predicated region
    $region18: #{tpu_custom_call.1} parent=1 // pred_check
      _
    $region19: #{tpu_custom_call.1} parent=1 // pred_check_branch
      %46 = sbr.rel (0) target = $region21
    $region20: #{tpu_custom_call.1} parent=1 // pred_region
      _
    $region21: #{tpu_custom_call.1} parent=1 // pred_fallthru
      _
    // Predicated region
    $region22: #{tpu_custom_call.1} parent=1 // pred_check
      _
    $region23: #{tpu_custom_call.1} parent=1 // pred_check_branch
      %48 = sbr.rel (0) target = $region25
    $region24: #{tpu_custom_call.1} parent=1 // pred_region
      %50 = vsyncadd [#allocation7], 0
      %s51 = sshll.u32 %s5, 4
      %s52 = int_to_ptr.hbm [resolvable:$true] %s51
      %s53 = sshll.u32 [#allocation8], 4
      %s54 = int_to_ptr.vmem [resolvable:$true] %s53
      %59 = dma.hbm_to_vmem [thread:$0]  %s52, 1024, %s54, [#allocation7], 64, 64, 4
    $region25: #{tpu_custom_call.1} parent=1 // pred_fallthru
      _
    // Predicated region
    $region26: #{tpu_custom_call.1} parent=1 // pred_check
      _
    $region27: #{tpu_custom_call.1} parent=1 // pred_check_branch
      %61 = sbr.rel (0) target = $region29
    $region28: #{tpu_custom_call.1} parent=1 // pred_region
      _
    $region29: #{tpu_custom_call.1} parent=1 // pred_fallthru
      _
    // Predicated region
    $region30: #{tpu_custom_call.1} parent=1 // pred_check
      _
    $region31: #{tpu_custom_call.1} parent=1 // pred_check_branch
      %63 = sbr.rel (0) target = $region33
    $region32: #{tpu_custom_call.1} parent=1 // pred_region
      %65 = vsyncadd [#allocation10], 0
      %s67 = sshll.u32 %s7, 4
      %s68 = int_to_ptr.hbm [resolvable:$true] %s67
      %s69 = sshll.u32 [#allocation9], 4
      %s70 = int_to_ptr.vmem [resolvable:$true] %s69
      %72 = dma.hbm_to_vmem [thread:$0]  %s68, 128, %s70, [#allocation10]
    $region33: #{tpu_custom_call.1} parent=1 // pred_fallthru
      _
    // Predicated region
    $region34: #{tpu_custom_call.1} parent=1 // pred_check
      _
    $region35: #{tpu_custom_call.1} parent=1 // pred_check_branch
      %74 = sbr.rel (0) target = $region37
    $region36: #{tpu_custom_call.1} parent=1 // pred_region
      %76 = dma.done [#allocation4], 64
    $region37: #{tpu_custom_call.1} parent=1 // pred_fallthru
      _
    // Predicated region
    $region38: #{tpu_custom_call.1} parent=1 // pred_check
      _
    $region39: #{tpu_custom_call.1} parent=1 // pred_check_branch
      %78 = sbr.rel (0) target = $region41
    $region40: #{tpu_custom_call.1} parent=1 // pred_region
      %80 = dma.done [#allocation7], 1024
    $region41: #{tpu_custom_call.1} parent=1 // pred_fallthru
      _
    // Predicated region
    $region42: #{tpu_custom_call.1} parent=1 // pred_check
      _
    $region43: #{tpu_custom_call.1} parent=1 // pred_check_branch
      %82 = sbr.rel (0) target = $region45
    $region44: #{tpu_custom_call.1} parent=1 // pred_region
      %84 = dma.done [#allocation7], 1024
    $region45: #{tpu_custom_call.1} parent=1 // pred_fallthru
      _
    // Predicated region
    $region46: #{tpu_custom_call.1} parent=1 // pred_check
      _
    $region47: #{tpu_custom_call.1} parent=1 // pred_check_branch
      %86 = sbr.rel (0) target = $region49
    $region48: #{tpu_custom_call.1} parent=1 // pred_region
      %88 = dma.done [#allocation10], 128
    $region49: #{tpu_custom_call.1} parent=1 // pred_fallthru
      _
    %p89 = scmp.eq.s32.totalorder 0, 0
    // Predicated region
    $region50: #{tpu_custom_call.1} parent=1 // pred_check
      %p90 = pneg %p89
    $region51: #{tpu_custom_call.1} parent=1 // pred_check_branch
      %92 = sbr.rel (%p90) target = $region53
    $region52: #{tpu_custom_call.1} parent=1 // pred_region
      %93 = vst [vmem:[#allocation2] sm:$0xff] 0.0
    $region53: #{tpu_custom_call.1} parent=1 // pred_fallthru
      _
    %v94 = vld [vmem:[#allocation3] sm:$0xf]
    %v95 = vld [vmem:[#allocation6] sm:$0xf]
    %v96 = vld [vmem:[#allocation6 + $0x4] sm:$0xf]
    %v97 = vld [vmem:[#allocation6 + $0x8] sm:$0xf]
    %v98 = vld [vmem:[#allocation6 + $0xc] sm:$0xf]
    %v99 = vld [vmem:[#allocation6 + $0x10] sm:$0xf]
    %v100 = vld [vmem:[#allocation6 + $0x14] sm:$0xf]
    %v101 = vld [vmem:[#allocation6 + $0x18] sm:$0xf]
    %v102 = vld [vmem:[#allocation6 + $0x1c] sm:$0xf]
    %v103 = vld [vmem:[#allocation6 + $0x20] sm:$0xf]
    %v104 = vld [vmem:[#allocation6 + $0x24] sm:$0xf]
    %v105 = vld [vmem:[#allocation6 + $0x28] sm:$0xf]
    %v106 = vld [vmem:[#allocation6 + $0x2c] sm:$0xf]
    %v107 = vld [vmem:[#allocation6 + $0x30] sm:$0xf]
    %v108 = vld [vmem:[#allocation6 + $0x34] sm:$0xf]
    %v109 = vld [vmem:[#allocation6 + $0x38] sm:$0xf]
    %v110 = vld [vmem:[#allocation6 + $0x3c] sm:$0xf]
    %v111 = vld [vmem:[%s2] sm:$0x1]
    %v113 = vperm.slane %v111, 0
    %v131 = vunpack.c.l.b16 %v95
    %v132 = vunpack.c.l.b16 %v96
    %v133 = vunpack.c.l.b16 %v97
    %v134 = vunpack.c.l.b16 %v98
    %v135 = vunpack.c.l.b16 %v99
    %v136 = vunpack.c.l.b16 %v100
    %v137 = vunpack.c.l.b16 %v101
    %v138 = vunpack.c.l.b16 %v102
    %v139 = vunpack.c.l.b16 %v103
    %v140 = vunpack.c.l.b16 %v104
    %v141 = vunpack.c.l.b16 %v105
    %v142 = vunpack.c.l.b16 %v106
    %v143 = vunpack.c.l.b16 %v107
    %v144 = vunpack.c.l.b16 %v108
    %v145 = vunpack.c.l.b16 %v109
    %v146 = vunpack.c.l.b16 %v110
    %v147 = vpack.c.b16 %v132, %v131
    %v148 = vpack.c.b16 %v134, %v133
    %v149 = vpack.c.b16 %v136, %v135
    %v150 = vpack.c.b16 %v138, %v137
    %v151 = vpack.c.b16 %v140, %v139
    %v152 = vpack.c.b16 %v142, %v141
    %v153 = vpack.c.b16 %v144, %v143
    %v154 = vpack.c.b16 %v146, %v145
    %163 = vmatpush.bf16.msra.mxu0 %v154
    %164 = vmatpush.bf16.msra.mxu0 %v153
    %165 = vmatpush.bf16.msra.mxu0 %v152
    %166 = vmatpush.bf16.msra.mxu0 %v151
    %167 = vmatpush.bf16.msra.mxu0 %v150
    %168 = vmatpush.bf16.msra.mxu0 %v149
    %169 = vmatpush.bf16.msra.mxu0 %v148
    %170 = vmatpush.bf16.msra.mxu0 %v147
    %171 = vmatmul.bf16.gmra.mxu0 %v94
    %v172 = vpop.f32.mrf.mxu0
    %v173 = vadd.f32 %v113, %v172
    %v174 = vpop.f32.mrf.mxu0
    %175 = vdwg.mxu0
    %v176 = vrot.slane %v173, 4
    %v177 = vadd.f32 %v173, %v176
    %v178 = vrot.slane %v177, 2
    %v179 = vadd.f32 %v177, %v178
    %v180 = vrot.slane %v179, 1
    %v181 = vadd.f32 %v179, %v180
    %v182 = vmul.f32 %v173, %v173
    %v183 = vrot.slane %v182, 4
    %v184 = vadd.f32 %v182, %v183
    %v185 = vrot.slane %v184, 2
    %v186 = vadd.f32 %v184, %v185
    %v187 = vrot.slane %v186, 1
    %v188 = vadd.f32 %v186, %v187
    %v189 = vmul.f32 %v181, 0.125
    %v190 = vmul.f32 %v188, 0.125
    %v191 = vmul.f32 %v189, %v189
    %v192 = vsub.f32 %v190, %v191
    %v193 = vld [vmem:[%s3] sm:$0x1]
    %v194 = vadd.f32 %v192, 1e-05
    %v195 = vrsqrt.pop %v194
    %v196 = vmul.f32 %v195, %v194
    %v197 = vmul.f32 %v196, %v195
    %v198 = vmul.f32 0.5, %v197
    %v199 = vsub.f32 1.5, %v198
    %v200 = vmul.f32 %v195, %v199
    %vm201 = vweird.f32 %v194
    %vm202 = vweird.f32 %v195
    %vm203 = vmor %vm201, %vm202
    %v204 = vsel %vm203, %v195, %v200
    %v205 = vmul.f32 %v193, %v204
    %v206 = vld [vmem:[%s4] sm:$0x1]
    %v207 = vmul.f32 %v189, %v205
    %v208 = vsub.f32 %v206, %v207
    %v210 = vperm.slane %v205, 0
    %v212 = vmul.f32 %v173, %v210
    %v214 = vperm.slane %v208, 0
    %v216 = vadd.f32 %v212, %v214
    %v217 = vmax.f32 %v216, 0.0
    %v218 = vld [vmem:[#allocation2] sm:$0xff]
    %v219 = vpack.c.bf16 %v217, %v217
    %v220 = vld [vmem:[#allocation8] sm:$0xf]
    %v221 = vld [vmem:[#allocation8 + $0x4] sm:$0xf]
    %v222 = vld [vmem:[#allocation8 + $0x8] sm:$0xf]
    %v223 = vld [vmem:[#allocation8 + $0xc] sm:$0xf]
    %v224 = vld [vmem:[#allocation8 + $0x10] sm:$0xf]
    %v225 = vld [vmem:[#allocation8 + $0x14] sm:$0xf]
    %v226 = vld [vmem:[#allocation8 + $0x18] sm:$0xf]
    %v227 = vld [vmem:[#allocation8 + $0x1c] sm:$0xf]
    %v228 = vld [vmem:[#allocation8 + $0x20] sm:$0xf]
    %v229 = vld [vmem:[#allocation8 + $0x24] sm:$0xf]
    %v230 = vld [vmem:[#allocation8 + $0x28] sm:$0xf]
    %v231 = vld [vmem:[#allocation8 + $0x2c] sm:$0xf]
    %v232 = vld [vmem:[#allocation8 + $0x30] sm:$0xf]
    %v233 = vld [vmem:[#allocation8 + $0x34] sm:$0xf]
    %v234 = vld [vmem:[#allocation8 + $0x38] sm:$0xf]
    %v235 = vld [vmem:[#allocation8 + $0x3c] sm:$0xf]
    %v252 = vunpack.c.l.b16 %v220
    %v253 = vunpack.c.l.b16 %v221
    %v254 = vunpack.c.l.b16 %v222
    %v255 = vunpack.c.l.b16 %v223
    %v256 = vunpack.c.l.b16 %v224
    %v257 = vunpack.c.l.b16 %v225
    %v258 = vunpack.c.l.b16 %v226
    %v259 = vunpack.c.l.b16 %v227
    %v260 = vunpack.c.l.b16 %v228
    %v261 = vunpack.c.l.b16 %v229
    %v262 = vunpack.c.l.b16 %v230
    %v263 = vunpack.c.l.b16 %v231
    %v264 = vunpack.c.l.b16 %v232
    %v265 = vunpack.c.l.b16 %v233
    %v266 = vunpack.c.l.b16 %v234
    %v267 = vunpack.c.l.b16 %v235
    %v268 = vpack.c.b16 %v253, %v252
    %v269 = vpack.c.b16 %v255, %v254
    %v270 = vpack.c.b16 %v257, %v256
    %v271 = vpack.c.b16 %v259, %v258
    %v272 = vpack.c.b16 %v261, %v260
    %v273 = vpack.c.b16 %v263, %v262
    %v274 = vpack.c.b16 %v265, %v264
    %v275 = vpack.c.b16 %v267, %v266
    %284 = vmatpush.bf16.msra.mxu0 %v275
    %285 = vmatpush.bf16.msra.mxu0 %v274
    %286 = vmatpush.bf16.msra.mxu0 %v273
    %287 = vmatpush.bf16.msra.mxu0 %v272
    %288 = vmatpush.bf16.msra.mxu0 %v271
    %289 = vmatpush.bf16.msra.mxu0 %v270
    %290 = vmatpush.bf16.msra.mxu0 %v269
    %291 = vmatpush.bf16.msra.mxu0 %v268
    %292 = vmatmul.bf16.gmra.mxu0 %v219
    %v293 = vpop.f32.mrf.mxu0
    %v294 = vadd.f32 0.0, %v293
    %v295 = vpop.f32.mrf.mxu0
    %296 = vdwg.mxu0
    %v297 = vadd.f32 %v218, %v294
    %298 = vst [vmem:[#allocation2] sm:$0xff] %v297
    // Predicated region
    $region54: #{tpu_custom_call.1} parent=1 // pred_check
      %p299 = pneg %p89
    $region55: #{tpu_custom_call.1} parent=1 // pred_check_branch
      %301 = sbr.rel (%p299) target = $region57
    $region56: #{tpu_custom_call.1} parent=1 // pred_region
      %v302 = vld [vmem:[#allocation2] sm:$0xff]
      %v303 = vld [vmem:[%s6] sm:$0x1]
      %v305 = vperm.slane %v303, 0
      %v307 = vadd.f32 %v302, %v305
      %v308 = vld [vmem:[#allocation9] sm:$0xff]
      %v309 = vadd.f32 %v307, %v308
      %310 = vst [vmem:[#allocation11] sm:$0xff] %v309
    $region57: #{tpu_custom_call.1} parent=1 // pred_fallthru
      _
    // Predicated region
    $region58: #{tpu_custom_call.1} parent=1 // pred_check
      _
    $region59: #{tpu_custom_call.1} parent=1 // pred_check_branch
      %312 = sbr.rel (0) target = $region61
    $region60: #{tpu_custom_call.1} parent=1 // pred_region
      %314 = vsyncadd [#allocation5], 0
      %s316 = sshll.u32 [#allocation11], 4
      %s317 = int_to_ptr.vmem [resolvable:$true] %s316
      %s318 = sshll.u32 %s8, 4
      %s319 = int_to_ptr.hbm [resolvable:$true] %s318
      %321 = dma.vmem_to_hbm [thread:$0]  %s317, 128, %s319, [#allocation5]
    $region61: #{tpu_custom_call.1} parent=1 // pred_fallthru
      _
    // Predicated region
    $region62: #{tpu_custom_call.1} parent=1 // pred_check
      _
    $region63: #{tpu_custom_call.1} parent=1 // pred_check_branch
      %323 = sbr.rel (0) target = $region65
    $region64: #{tpu_custom_call.1} parent=1 // pred_region
      %325 = dma.done [#allocation5], 128
    $region65: #{tpu_custom_call.1} parent=1 // pred_fallthru
      _
    %326 = vsyncpa [#allocation4], 1
    %327 = vsyncpa [#allocation7], 1
    %328 = vsyncpa [#allocation10], 1
    %329 = vsyncpa [#allocation5], 1

</llo_original>
